<compile_context>
chip_gen: v7x
topology: tpu7x:2x2x1
jax: 0.10.0
libtpu: 0.0.40
codegen_flags: <defaults>
</compile_context>

<pallas_src>
import functools

import jax
import jax.numpy as jnp
from jax.experimental import pallas as pl
from jax.experimental.pallas import tpu as pltpu

LANE = 128             # pad all feature dims to a multiple of the lane width
SUBLANE_F32 = 8        # f32 sublane count (bias slab rows)
BATCH_ALIGN = 16       # bf16 sublane packing -> batch tiles are multiples of 16
MAX_BATCH_TILE = 1024  # rows per grid step once the batch gets large


def _round_up(n, m):
    return (n + m - 1) // m * m


def _mlp_kernel(x_ref, w_ref, b_ref, o_ref):
    """Whole 8-layer MLP on one (TB, D) batch tile; everything VMEM-resident.

    x_ref: (TB, D)     bf16  padded activations
    w_ref: (L, D, D)   bf16  padded weight slab (layer l = w_ref[l])
    b_ref: (L, 8, D)   f32   padded bias slab, bias in row 0
    o_ref: (TB, D)     f32   padded output (lane-dense, unmasked store)
    """
    num_layers = w_ref.shape[0]
    h = x_ref[...]                                           # bf16
    for l in range(num_layers):                              # static unroll (8)
        y = jnp.dot(h, w_ref[l],                             # bf16 x bf16 on MXU
                    preferred_element_type=jnp.float32)      # f32 accumulate
        y = y + b_ref[l, 0:1, :]                             # f32 bias, broadcast in-kernel
        if l < num_layers - 1:
            h = jnp.maximum(y, 0.0).astype(jnp.bfloat16)     # ReLU, keep h in bf16
        else:
            h = y                                            # final layer stays f32
    o_ref[...] = h


def pack_params(params):
    """Pack per-layer (W:(in,out), b:(out,)) into two padded slabs.

    Returns:
      w_slab: (L, D, D) bf16, zero-padded, layer l weights at [:in, :out]
      b_slab: (L, 8, D) f32,  zero-padded, layer l bias at [l, 0, :out]
    """
    num_layers = len(params)
    dims = [params[0][0].shape[0]] + [w.shape[1] for w, _ in params]
    d = _round_up(max(dims), LANE)

    w_slab = jnp.zeros((num_layers, d, d), jnp.float32)
    b_slab = jnp.zeros((num_layers, SUBLANE_F32, d), jnp.float32)
    for l, (w, b) in enumerate(params):
        fi, fo = w.shape
        w_slab = w_slab.at[l, :fi, :fo].set(w)
        b_slab = b_slab.at[l, 0, :fo].set(b)
    return w_slab.astype(jnp.bfloat16), b_slab


def _pick_batch_tile(batch):
    """At least ~4 grid steps for moderate batches (v7x 2-TC sharding), large
    tiles for big batches (amortize per-step overhead on v5e/v6e)."""
    tb = _round_up(max(pl.cdiv(batch, 4), 1), BATCH_ALIGN)
    return min(MAX_BATCH_TILE, tb)


@functools.partial(jax.jit, static_argnames=("out_size",))
def linear_qnet_forward(x, w_slab, b_slab, out_size):
    batch, in_size = x.shape
    num_layers, _, d = b_slab.shape

    tb = _pick_batch_tile(batch)
    b_pad = _round_up(batch, BATCH_ALIGN)
    grid = (pl.cdiv(b_pad, tb),)

    # Pad only the feature dim (and batch to a bf16 sublane multiple); no full
    # HBM copy of a (b_pad, D) f32 slab.
    x_pad = jax.lax.pad(
        x.astype(jnp.bfloat16),
        jnp.array(0, dtype=jnp.bfloat16),
        [(0, b_pad - batch, 0), (0, d - in_size, 0)],
    )

    out_pad = pl.pallas_call(
        _mlp_kernel,
        out_shape=jax.ShapeDtypeStruct((b_pad, d), jnp.float32),
        grid=grid,
        in_specs=[
            pl.BlockSpec((tb, d), lambda i: (i, 0)),                 # x tile (bf16)
            pl.BlockSpec((num_layers, d, d), lambda i: (0, 0, 0),    # weights, constant index
                         pipeline_mode=pl.Buffered(1)),
            pl.BlockSpec((num_layers, SUBLANE_F32, d),               # biases, constant index
                         lambda i: (0, 0, 0),
                         pipeline_mode=pl.Buffered(1)),
        ],
        out_specs=pl.BlockSpec((tb, d), lambda i: (i, 0)),
        compiler_params=pltpu.CompilerParams(
            dimension_semantics=("parallel",)),   # shards batch across TCs on v7x
    )(x_pad, w_slab, b_slab)

    return out_pad[:batch, :out_size]


def init_params(key, input_size, hidden_size, output_size):
    """Mimics nn.Linear's U(-1/sqrt(fan_in), 1/sqrt(fan_in)) init. W is (in, out)."""
    sizes = [input_size] + [hidden_size] * 7 + [output_size]
    params = []
    for i in range(8):
        fan_in, fan_out = sizes[i], sizes[i + 1]
        key, kw, kb = jax.random.split(key, 3)
        bound = 1.0 / (fan_in ** 0.5)
        w = jax.random.uniform(kw, (fan_in, fan_out), jnp.float32, -bound, bound)
        b = jax.random.uniform(kb, (fan_out,), jnp.float32, -bound, bound)
        params.append((w, b))
    return params


def reference_forward(x, params):
    """Pure f32 reference (module semantics)."""
    h = x
    for i, (w, b) in enumerate(params):
        h = jnp.dot(h, w, precision=jax.lax.Precision.HIGHEST) + b
        if i < len(params) - 1:
            h = jnp.maximum(h, 0.0)
    return h


def reference_forward_bf16(x, params):
    """Emulates the kernel numerics: bf16 matmul operands, f32 accumulate/bias/ReLU."""
    h = x.astype(jnp.float32)
    for i, (w, b) in enumerate(params):
        h = jnp.dot(h.astype(jnp.bfloat16), w.astype(jnp.bfloat16),
                    preferred_element_type=jnp.float32) + b
        if i < len(params) - 1:
            h = jnp.maximum(h, 0.0)
    return h


if __name__ == "__main__":
    INPUT_SIZE = 16
    HIDDEN_SIZE = 32
    OUTPUT_SIZE = 4
    BATCH = 8

    key = jax.random.PRNGKey(0)
    kx, kp = jax.random.split(key)
    x = jax.random.normal(kx, (BATCH, INPUT_SIZE), jnp.float32)
    params = init_params(kp, INPUT_SIZE, HIDDEN_SIZE, OUTPUT_SIZE)

    w_slab, b_slab = pack_params(params)

    out = linear_qnet_forward(x, w_slab, b_slab, out_size=OUTPUT_SIZE)
    out = jax.block_until_ready(out)
    assert out.shape == (BATCH, OUTPUT_SIZE), out.shape

    # Tight check vs a reference with identical bf16-operand numerics.
    ref_bf16 = reference_forward_bf16(x, params)
    assert jnp.allclose(out, ref_bf16, atol=1e-4, rtol=1e-4), \
        "mismatch vs bf16-emulated reference"

    # Semantic check vs the full-f32 module (bf16 weight-quantization tolerance).
    ref_f32 = reference_forward(x, params)
    assert jnp.allclose(out, ref_f32, atol=3e-2, rtol=3e-2), \
        "mismatch vs f32 reference"

    # TODO(synk): Linear_QNet.save() (torch.save to ./model) is host-side file I/O
    # with no kernel equivalent.
    print("KERNEL_OK")
</pallas_src>

<mosaic_0001>
module attributes {stable_mosaic.version = 11 : i64} {
  func.func @_mlp_kernel(%arg0: i32, %arg1: memref<16x128xbf16, #tpu.memory_space<vmem>>, %arg2: memref<8x128x128xbf16, #tpu.memory_space<vmem>>, %arg3: memref<8x8x128xf32, #tpu.memory_space<vmem>>, %arg4: memref<16x128xf32, #tpu.memory_space<vmem>>) attributes {dimension_semantics = [#tpu.dimension_semantics<parallel>], iteration_bounds = array<i64: 1>, scalar_prefetch = 0 : i64, scratch_operands = 0 : i64, tpu.core_type = #tpu.core_type<tc>, window_params = [{transform_indices = @transform_0, window_bounds = array<i64: 16, 128>}, {pipeline_mode = #tpu.pipeline_mode<synchronous>, transform_indices = @transform_1, window_bounds = array<i64: 8, 128, 128>}, {pipeline_mode = #tpu.pipeline_mode<synchronous>, transform_indices = @transform_2, window_bounds = array<i64: 8, 8, 128>}, {transform_indices = @transform_3, window_bounds = array<i64: 16, 128>}]} {
    %c0 = arith.constant 0 : index
    %c0_0 = arith.constant 0 : index
    %0 = vector.load %arg1[%c0, %c0_0] : memref<16x128xbf16, #tpu.memory_space<vmem>>, vector<16x128xbf16>
    %c0_1 = arith.constant 0 : index
    %c0_2 = arith.constant 0 : index
    %c0_3 = arith.constant 0 : index
    %1 = vector.load %arg2[%c0_1, %c0_2, %c0_3] : memref<8x128x128xbf16, #tpu.memory_space<vmem>>, vector<1x128x128xbf16>
    %2 = vector.shape_cast %1 : vector<1x128x128xbf16> to vector<128x128xbf16>
    %cst = arith.constant dense<0.000000e+00> : vector<16x128xf32>
    %3 = tpu.matmul %0, %2, %cst {dimension_numbers = #tpu.dot_dimension_numbers<[1], [0], [0], [1], [0, 0, 1, 1], [], []>} : vector<16x128xbf16>, vector<128x128xbf16>, vector<16x128xf32> -> vector<16x128xf32>
    %c0_4 = arith.constant 0 : index
    %c0_5 = arith.constant 0 : index
    %c0_6 = arith.constant 0 : index
    %4 = vector.load %arg3[%c0_4, %c0_5, %c0_6] : memref<8x8x128xf32, #tpu.memory_space<vmem>>, vector<1x1x128xf32>
    %5 = vector.shape_cast %4 : vector<1x1x128xf32> to vector<1x128xf32>
    %6 = vector.broadcast %5 : vector<1x128xf32> to vector<16x128xf32>
    %7 = arith.addf %3, %6 : vector<16x128xf32>
    %cst_7 = arith.constant 0.000000e+00 : f32
    %8 = vector.broadcast %cst_7 : f32 to vector<16x128xf32>
    %9 = arith.maximumf %7, %8 : vector<16x128xf32>
    %10 = arith.truncf %9 : vector<16x128xf32> to vector<16x128xbf16>
    %c1 = arith.constant 1 : index
    %c0_8 = arith.constant 0 : index
    %c0_9 = arith.constant 0 : index
    %11 = vector.load %arg2[%c1, %c0_8, %c0_9] : memref<8x128x128xbf16, #tpu.memory_space<vmem>>, vector<1x128x128xbf16>
    %12 = vector.shape_cast %11 : vector<1x128x128xbf16> to vector<128x128xbf16>
    %cst_10 = arith.constant dense<0.000000e+00> : vector<16x128xf32>
    %13 = tpu.matmul %10, %12, %cst_10 {dimension_numbers = #tpu.dot_dimension_numbers<[1], [0], [0], [1], [0, 0, 1, 1], [], []>} : vector<16x128xbf16>, vector<128x128xbf16>, vector<16x128xf32> -> vector<16x128xf32>
    %c1_11 = arith.constant 1 : index
    %c0_12 = arith.constant 0 : index
    %c0_13 = arith.constant 0 : index
    %14 = vector.load %arg3[%c1_11, %c0_12, %c0_13] : memref<8x8x128xf32, #tpu.memory_space<vmem>>, vector<1x1x128xf32>
    %15 = vector.shape_cast %14 : vector<1x1x128xf32> to vector<1x128xf32>
    %16 = vector.broadcast %15 : vector<1x128xf32> to vector<16x128xf32>
    %17 = arith.addf %13, %16 : vector<16x128xf32>
    %cst_14 = arith.constant 0.000000e+00 : f32
    %18 = vector.broadcast %cst_14 : f32 to vector<16x128xf32>
    %19 = arith.maximumf %17, %18 : vector<16x128xf32>
    %20 = arith.truncf %19 : vector<16x128xf32> to vector<16x128xbf16>
    %c2 = arith.constant 2 : index
    %c0_15 = arith.constant 0 : index
    %c0_16 = arith.constant 0 : index
    %21 = vector.load %arg2[%c2, %c0_15, %c0_16] : memref<8x128x128xbf16, #tpu.memory_space<vmem>>, vector<1x128x128xbf16>
    %22 = vector.shape_cast %21 : vector<1x128x128xbf16> to vector<128x128xbf16>
    %cst_17 = arith.constant dense<0.000000e+00> : vector<16x128xf32>
    %23 = tpu.matmul %20, %22, %cst_17 {dimension_numbers = #tpu.dot_dimension_numbers<[1], [0], [0], [1], [0, 0, 1, 1], [], []>} : vector<16x128xbf16>, vector<128x128xbf16>, vector<16x128xf32> -> vector<16x128xf32>
    %c2_18 = arith.constant 2 : index
    %c0_19 = arith.constant 0 : index
    %c0_20 = arith.constant 0 : index
    %24 = vector.load %arg3[%c2_18, %c0_19, %c0_20] : memref<8x8x128xf32, #tpu.memory_space<vmem>>, vector<1x1x128xf32>
    %25 = vector.shape_cast %24 : vector<1x1x128xf32> to vector<1x128xf32>
    %26 = vector.broadcast %25 : vector<1x128xf32> to vector<16x128xf32>
    %27 = arith.addf %23, %26 : vector<16x128xf32>
    %cst_21 = arith.constant 0.000000e+00 : f32
    %28 = vector.broadcast %cst_21 : f32 to vector<16x128xf32>
    %29 = arith.maximumf %27, %28 : vector<16x128xf32>
    %30 = arith.truncf %29 : vector<16x128xf32> to vector<16x128xbf16>
    %c3 = arith.constant 3 : index
    %c0_22 = arith.constant 0 : index
    %c0_23 = arith.constant 0 : index
    %31 = vector.load %arg2[%c3, %c0_22, %c0_23] : memref<8x128x128xbf16, #tpu.memory_space<vmem>>, vector<1x128x128xbf16>
    %32 = vector.shape_cast %31 : vector<1x128x128xbf16> to vector<128x128xbf16>
    %cst_24 = arith.constant dense<0.000000e+00> : vector<16x128xf32>
    %33 = tpu.matmul %30, %32, %cst_24 {dimension_numbers = #tpu.dot_dimension_numbers<[1], [0], [0], [1], [0, 0, 1, 1], [], []>} : vector<16x128xbf16>, vector<128x128xbf16>, vector<16x128xf32> -> vector<16x128xf32>
    %c3_25 = arith.constant 3 : index
    %c0_26 = arith.constant 0 : index
    %c0_27 = arith.constant 0 : index
    %34 = vector.load %arg3[%c3_25, %c0_26, %c0_27] : memref<8x8x128xf32, #tpu.memory_space<vmem>>, vector<1x1x128xf32>
    %35 = vector.shape_cast %34 : vector<1x1x128xf32> to vector<1x128xf32>
    %36 = vector.broadcast %35 : vector<1x128xf32> to vector<16x128xf32>
    %37 = arith.addf %33, %36 : vector<16x128xf32>
    %cst_28 = arith.constant 0.000000e+00 : f32
    %38 = vector.broadcast %cst_28 : f32 to vector<16x128xf32>
    %39 = arith.maximumf %37, %38 : vector<16x128xf32>
    %40 = arith.truncf %39 : vector<16x128xf32> to vector<16x128xbf16>
    %c4 = arith.constant 4 : index
    %c0_29 = arith.constant 0 : index
    %c0_30 = arith.constant 0 : index
    %41 = vector.load %arg2[%c4, %c0_29, %c0_30] : memref<8x128x128xbf16, #tpu.memory_space<vmem>>, vector<1x128x128xbf16>
    %42 = vector.shape_cast %41 : vector<1x128x128xbf16> to vector<128x128xbf16>
    %cst_31 = arith.constant dense<0.000000e+00> : vector<16x128xf32>
    %43 = tpu.matmul %40, %42, %cst_31 {dimension_numbers = #tpu.dot_dimension_numbers<[1], [0], [0], [1], [0, 0, 1, 1], [], []>} : vector<16x128xbf16>, vector<128x128xbf16>, vector<16x128xf32> -> vector<16x128xf32>
    %c4_32 = arith.constant 4 : index
    %c0_33 = arith.constant 0 : index
    %c0_34 = arith.constant 0 : index
    %44 = vector.load %arg3[%c4_32, %c0_33, %c0_34] : memref<8x8x128xf32, #tpu.memory_space<vmem>>, vector<1x1x128xf32>
    %45 = vector.shape_cast %44 : vector<1x1x128xf32> to vector<1x128xf32>
    %46 = vector.broadcast %45 : vector<1x128xf32> to vector<16x128xf32>
    %47 = arith.addf %43, %46 : vector<16x128xf32>
    %cst_35 = arith.constant 0.000000e+00 : f32
    %48 = vector.broadcast %cst_35 : f32 to vector<16x128xf32>
    %49 = arith.maximumf %47, %48 : vector<16x128xf32>
    %50 = arith.truncf %49 : vector<16x128xf32> to vector<16x128xbf16>
    %c5 = arith.constant 5 : index
    %c0_36 = arith.constant 0 : index
    %c0_37 = arith.constant 0 : index
    %51 = vector.load %arg2[%c5, %c0_36, %c0_37] : memref<8x128x128xbf16, #tpu.memory_space<vmem>>, vector<1x128x128xbf16>
    %52 = vector.shape_cast %51 : vector<1x128x128xbf16> to vector<128x128xbf16>
    %cst_38 = arith.constant dense<0.000000e+00> : vector<16x128xf32>
    %53 = tpu.matmul %50, %52, %cst_38 {dimension_numbers = #tpu.dot_dimension_numbers<[1], [0], [0], [1], [0, 0, 1, 1], [], []>} : vector<16x128xbf16>, vector<128x128xbf16>, vector<16x128xf32> -> vector<16x128xf32>
    %c5_39 = arith.constant 5 : index
    %c0_40 = arith.constant 0 : index
    %c0_41 = arith.constant 0 : index
    %54 = vector.load %arg3[%c5_39, %c0_40, %c0_41] : memref<8x8x128xf32, #tpu.memory_space<vmem>>, vector<1x1x128xf32>
    %55 = vector.shape_cast %54 : vector<1x1x128xf32> to vector<1x128xf32>
    %56 = vector.broadcast %55 : vector<1x128xf32> to vector<16x128xf32>
    %57 = arith.addf %53, %56 : vector<16x128xf32>
    %cst_42 = arith.constant 0.000000e+00 : f32
    %58 = vector.broadcast %cst_42 : f32 to vector<16x128xf32>
    %59 = arith.maximumf %57, %58 : vector<16x128xf32>
    %60 = arith.truncf %59 : vector<16x128xf32> to vector<16x128xbf16>
    %c6 = arith.constant 6 : index
    %c0_43 = arith.constant 0 : index
    %c0_44 = arith.constant 0 : index
    %61 = vector.load %arg2[%c6, %c0_43, %c0_44] : memref<8x128x128xbf16, #tpu.memory_space<vmem>>, vector<1x128x128xbf16>
    %62 = vector.shape_cast %61 : vector<1x128x128xbf16> to vector<128x128xbf16>
    %cst_45 = arith.constant dense<0.000000e+00> : vector<16x128xf32>
    %63 = tpu.matmul %60, %62, %cst_45 {dimension_numbers = #tpu.dot_dimension_numbers<[1], [0], [0], [1], [0, 0, 1, 1], [], []>} : vector<16x128xbf16>, vector<128x128xbf16>, vector<16x128xf32> -> vector<16x128xf32>
    %c6_46 = arith.constant 6 : index
    %c0_47 = arith.constant 0 : index
    %c0_48 = arith.constant 0 : index
    %64 = vector.load %arg3[%c6_46, %c0_47, %c0_48] : memref<8x8x128xf32, #tpu.memory_space<vmem>>, vector<1x1x128xf32>
    %65 = vector.shape_cast %64 : vector<1x1x128xf32> to vector<1x128xf32>
    %66 = vector.broadcast %65 : vector<1x128xf32> to vector<16x128xf32>
    %67 = arith.addf %63, %66 : vector<16x128xf32>
    %cst_49 = arith.constant 0.000000e+00 : f32
    %68 = vector.broadcast %cst_49 : f32 to vector<16x128xf32>
    %69 = arith.maximumf %67, %68 : vector<16x128xf32>
    %70 = arith.truncf %69 : vector<16x128xf32> to vector<16x128xbf16>
    %c7 = arith.constant 7 : index
    %c0_50 = arith.constant 0 : index
    %c0_51 = arith.constant 0 : index
    %71 = vector.load %arg2[%c7, %c0_50, %c0_51] : memref<8x128x128xbf16, #tpu.memory_space<vmem>>, vector<1x128x128xbf16>
    %72 = vector.shape_cast %71 : vector<1x128x128xbf16> to vector<128x128xbf16>
    %cst_52 = arith.constant dense<0.000000e+00> : vector<16x128xf32>
    %73 = tpu.matmul %70, %72, %cst_52 {dimension_numbers = #tpu.dot_dimension_numbers<[1], [0], [0], [1], [0, 0, 1, 1], [], []>} : vector<16x128xbf16>, vector<128x128xbf16>, vector<16x128xf32> -> vector<16x128xf32>
    %c7_53 = arith.constant 7 : index
    %c0_54 = arith.constant 0 : index
    %c0_55 = arith.constant 0 : index
    %74 = vector.load %arg3[%c7_53, %c0_54, %c0_55] : memref<8x8x128xf32, #tpu.memory_space<vmem>>, vector<1x1x128xf32>
    %75 = vector.shape_cast %74 : vector<1x1x128xf32> to vector<1x128xf32>
    %76 = vector.broadcast %75 : vector<1x128xf32> to vector<16x128xf32>
    %77 = arith.addf %73, %76 : vector<16x128xf32>
    %c0_56 = arith.constant 0 : index
    %c0_57 = arith.constant 0 : index
    %78 = vector.load %arg4[%c0_56, %c0_57] : memref<16x128xf32, #tpu.memory_space<vmem>>, vector<16x128xf32>
    tpu.vector_store %arg4[%c0_56, %c0_57], %77 {strides = array<i32>} : memref<16x128xf32, #tpu.memory_space<vmem>>, vector<16x128xf32>,
    return
  }
  func.func @transform_0(%arg0: i32) -> (i32, i32) {
    %c0_i32 = arith.constant 0 : i32
    %c0_i32_0 = arith.constant 0 : i32
    return %arg0, %c0_i32 : i32, i32
  }
  func.func @transform_1(%arg0: i32) -> (i32, i32, i32) {
    %c0_i32 = arith.constant 0 : i32
    %c0_i32_0 = arith.constant 0 : i32
    %c0_i32_1 = arith.constant 0 : i32
    %c0_i32_2 = arith.constant 0 : i32
    return %c0_i32, %c0_i32_0, %c0_i32_1 : i32, i32, i32
  }
  func.func @transform_2(%arg0: i32) -> (i32, i32, i32) {
    %c0_i32 = arith.constant 0 : i32
    %c0_i32_0 = arith.constant 0 : i32
    %c0_i32_1 = arith.constant 0 : i32
    %c0_i32_2 = arith.constant 0 : i32
    return %c0_i32, %c0_i32_0, %c0_i32_1 : i32, i32, i32
  }
  func.func @transform_3(%arg0: i32) -> (i32, i32) {
    %c0_i32 = arith.constant 0 : i32
    %c0_i32_0 = arith.constant 0 : i32
    return %arg0, %c0_i32 : i32, i32
  }
}

</mosaic_0001>

<llo_original>
// kernel: linear_qnet_forward.1
$region0: #{linear_qnet_forward.1}
  #allocation0 [shape = 'u32[]', space=smem, size = 0x4, offset = 0x4, fixed_abs, tag = 'smem constant byte address 0x4 - core index']
  #allocation1 [shape = 'u32[144,128]{1,0:T(1,128)}', space=vmem, size = 0x12000, scoped, tag = 'internal scratch']
  %s0 = inlined_call_operand.vmem [shape: bf16[16,128], index: 0, kind: input, shape index: {}]
  %s1 = inlined_call_operand.hbm [shape: bf16[8,128,128], index: 1, kind: input, shape index: {}]
  %s2 = inlined_call_operand.hbm [shape: f32[8,8,128], index: 2, kind: input, shape index: {}]
  %s3 = inlined_call_operand.vmem [shape: f32[16,128], index: 3, kind: output, shape index: {}]
  %s4 = sld [smem:[#allocation0]]
  $region30: #{linear_qnet_forward.1} parent=0
    _
  %s6 = ssub.s32 1, %s4
  %s7 = scalar_select 0, %s6, %s4
  $region1: #{linear_qnet_forward.1} parent=0
    #allocation2 [shape = 'u8[262144]{0}', space=vmem, size = 0x40000, scoped, tag = 'input window, operand 1, single buffered']
    #allocation3 [shape = 's32[1]{0}', space=sflag, size = 0x4, scoped, tag = 'scoped memory for linear_qnet_forward.1']
    #allocation4 [shape = 'u8[32768]{0}', space=vmem, size = 0x8000, scoped, tag = 'input window, operand 2, single buffered']
    #allocation5 [shape = 's32[1]{0}', space=sflag, size = 0x4, scoped, tag = 'scoped memory for linear_qnet_forward.1']
    %8 = vsyncpa [#allocation3], 0
    %9 = vsyncpa [#allocation5], 0
    // Predicated region
    $region2: #{linear_qnet_forward.1} parent=1 // pred_check
      _
    $region3: #{linear_qnet_forward.1} parent=1 // pred_check_branch
      %11 = sbr.rel (0) target = $region5
    $region4: #{linear_qnet_forward.1} parent=1 // pred_region
      _
    $region5: #{linear_qnet_forward.1} parent=1 // pred_fallthru
      _
    // Predicated region
    $region6: #{linear_qnet_forward.1} parent=1 // pred_check
      _
    $region7: #{linear_qnet_forward.1} parent=1 // pred_check_branch
      %13 = sbr.rel (0) target = $region9
    $region8: #{linear_qnet_forward.1} parent=1 // pred_region
      %s15 = ssub.s32 8192, 8192
      %16 = vsyncadd [#allocation3], %s15
      %s17 = sshll.u32 [#allocation2], 4
      %s18 = int_to_ptr.vmem [resolvable:$true] %s17
      %23 = dma.hbm_to_vmem [thread:$0]  %s1, 8192, %s18, [#allocation3], 64, 64, 4
    $region9: #{linear_qnet_forward.1} parent=1 // pred_fallthru
      _
    // Predicated region
    $region10: #{linear_qnet_forward.1} parent=1 // pred_check
      _
    $region11: #{linear_qnet_forward.1} parent=1 // pred_check_branch
      %25 = sbr.rel (0) target = $region13
    $region12: #{linear_qnet_forward.1} parent=1 // pred_region
      %s27 = ssub.s32 1024, 1024
      %28 = vsyncadd [#allocation5], %s27
      %s29 = sshll.u32 [#allocation4], 4
      %s30 = int_to_ptr.vmem [resolvable:$true] %s29
      %35 = dma.hbm_to_vmem [thread:$0]  %s2, 1024, %s30, [#allocation5], 128, 128, 8
    $region13: #{linear_qnet_forward.1} parent=1 // pred_fallthru
      _
    // Predicated region
    $region14: #{linear_qnet_forward.1} parent=1 // pred_check
      _
    $region15: #{linear_qnet_forward.1} parent=1 // pred_check_branch
      %37 = sbr.rel (0) target = $region17
    $region16: #{linear_qnet_forward.1} parent=1 // pred_region
      %38 = dma.done [#allocation3], 8192
    $region17: #{linear_qnet_forward.1} parent=1 // pred_fallthru
      _
    // Predicated region
    $region18: #{linear_qnet_forward.1} parent=1 // pred_check
      _
    $region19: #{linear_qnet_forward.1} parent=1 // pred_check_branch
      %40 = sbr.rel (0) target = $region21
    $region20: #{linear_qnet_forward.1} parent=1 // pred_region
      %41 = dma.done [#allocation5], 1024
    $region21: #{linear_qnet_forward.1} parent=1 // pred_fallthru
      _
    %v43 = vld [vmem:[%s0] sm:$0xf]
    %v44 = vld [vmem:[%s0 + $0x4] sm:$0xf]
    %v45 = vld [vmem:[#allocation2] sm:$0xf]
    %v46 = vld [vmem:[#allocation2 + $0x4] sm:$0xf]
    %v47 = vld [vmem:[#allocation2 + $0x8] sm:$0xf]
    %v48 = vld [vmem:[#allocation2 + $0xc] sm:$0xf]
    %v49 = vld [vmem:[#allocation2 + $0x10] sm:$0xf]
    %v50 = vld [vmem:[#allocation2 + $0x14] sm:$0xf]
    %v51 = vld [vmem:[#allocation2 + $0x18] sm:$0xf]
    %v52 = vld [vmem:[#allocation2 + $0x1c] sm:$0xf]
    %v53 = vld [vmem:[#allocation2 + $0x20] sm:$0xf]
    %v54 = vld [vmem:[#allocation2 + $0x24] sm:$0xf]
    %v55 = vld [vmem:[#allocation2 + $0x28] sm:$0xf]
    %v56 = vld [vmem:[#allocation2 + $0x2c] sm:$0xf]
    %v57 = vld [vmem:[#allocation2 + $0x30] sm:$0xf]
    %v58 = vld [vmem:[#allocation2 + $0x34] sm:$0xf]
    %v59 = vld [vmem:[#allocation2 + $0x38] sm:$0xf]
    %v60 = vld [vmem:[#allocation2 + $0x3c] sm:$0xf]
    %v61 = vld [vmem:[#allocation4] sm:$0x1]
    %v62 = vlaneseq
    %v63 = vshrl.u32 %v62, 7
    %v64 = vsub.s32 0, %v63
    %v65 = vrot.slane %v61, %v64
    %v68 = vunpack.c.l.b16 %v43
    %v69 = vunpack.c.l.b16 %v44
    %v70 = vpack.c.b16 %v69, %v68
    %v88 = vunpack.c.l.b16 %v45
    %v89 = vunpack.c.l.b16 %v46
    %v90 = vunpack.c.l.b16 %v47
    %v91 = vunpack.c.l.b16 %v48
    %v92 = vunpack.c.l.b16 %v49
    %v93 = vunpack.c.l.b16 %v50
    %v94 = vunpack.c.l.b16 %v51
    %v95 = vunpack.c.l.b16 %v52
    %v96 = vunpack.c.l.b16 %v53
    %v97 = vunpack.c.l.b16 %v54
    %v98 = vunpack.c.l.b16 %v55
    %v99 = vunpack.c.l.b16 %v56
    %v100 = vunpack.c.l.b16 %v57
    %v101 = vunpack.c.l.b16 %v58
    %v102 = vunpack.c.l.b16 %v59
    %v103 = vunpack.c.l.b16 %v60
    %v104 = vpack.c.b16 %v89, %v88
    %v105 = vpack.c.b16 %v91, %v90
    %v106 = vpack.c.b16 %v93, %v92
    %v107 = vpack.c.b16 %v95, %v94
    %v108 = vpack.c.b16 %v97, %v96
    %v109 = vpack.c.b16 %v99, %v98
    %v110 = vpack.c.b16 %v101, %v100
    %v111 = vpack.c.b16 %v103, %v102
    %120 = vmatprep.subr.bf16.mxu0 0
    %121 = vmatpush1.bf16.msra.mxu0 %v104
    %122 = vmatprep.subr.bf16.mxu0 0
    %123 = vmatpush1.bf16.msra.mxu0 %v105
    %124 = vmatprep.subr.bf16.mxu0 0
    %125 = vmatpush1.bf16.msra.mxu0 %v106
    %126 = vmatprep.subr.bf16.mxu0 0
    %127 = vmatpush1.bf16.msra.mxu0 %v107
    %128 = vmatprep.subr.bf16.mxu0 0
    %129 = vmatpush1.bf16.msra.mxu0 %v108
    %130 = vmatprep.subr.bf16.mxu0 0
    %131 = vmatpush1.bf16.msra.mxu0 %v109
    %132 = vmatprep.subr.bf16.mxu0 0
    %133 = vmatpush1.bf16.msra.mxu0 %v110
    %134 = vmatprep.subr.bf16.mxu0 0
    %135 = vmatpush1.bf16.msra.mxu0 %v111
    %136 = vmatprep.subr.bf16.mxu0 0
    %137 = vmatpush1.bf16.msra.mxu0 0
    %138 = vmatprep.subr.bf16.mxu0 0
    %139 = vmatpush1.bf16.msra.mxu0 0
    %140 = vmatprep.subr.bf16.mxu0 0
    %141 = vmatpush1.bf16.msra.mxu0 0
    %142 = vmatprep.subr.bf16.mxu0 0
    %143 = vmatpush1.bf16.msra.mxu0 0
    %144 = vmatprep.subr.bf16.mxu0 0
    %145 = vmatpush1.bf16.msra.mxu0 0
    %146 = vmatprep.subr.bf16.mxu0 0
    %147 = vmatpush1.bf16.msra.mxu0 0
    %148 = vmatprep.subr.bf16.mxu0 0
    %149 = vmatpush1.bf16.msra.mxu0 0
    %150 = vmatprep.subr.bf16.mxu0 0
    %151 = vmatpush1.bf16.msra.mxu0 0
    %152 = vmatprep.mubr.bf16.mxu0 0
    %153 = vmatmul.mubr.bf16.gmra.mrb[0].mxu0 %v70
    %v154 = vpop.f32.mrb[0].mxu0
    %v155 = vadd.f32 %v65, %v154
    %v156 = vpop.f32.mrb[0].mxu0
    %v157 = vpop.f32.mrb[0].mxu0
    %v158 = vadd.f32 %v65, %v157
    %v159 = vpop.f32.mrb[0].mxu0
    %160 = vdwg.mxu0
    %v161 = vmax.f32 %v155, 0.0
    %v162 = vmax.f32 %v158, 0.0
    %v163 = vpack.c.bf16 %v162, %v161
    %s164 = scalar_lea.vmem [#allocation2], 64
    %v165 = vld [vmem:[%s164] sm:$0xf]
    %v166 = vld [vmem:[%s164 + $0x4] sm:$0xf]
    %v167 = vld [vmem:[%s164 + $0x8] sm:$0xf]
    %v168 = vld [vmem:[%s164 + $0xc] sm:$0xf]
    %v169 = vld [vmem:[%s164 + $0x10] sm:$0xf]
    %v170 = vld [vmem:[%s164 + $0x14] sm:$0xf]
    %v171 = vld [vmem:[%s164 + $0x18] sm:$0xf]
    %v172 = vld [vmem:[%s164 + $0x1c] sm:$0xf]
    %v173 = vld [vmem:[%s164 + $0x20] sm:$0xf]
    %v174 = vld [vmem:[%s164 + $0x24] sm:$0xf]
    %v175 = vld [vmem:[%s164 + $0x28] sm:$0xf]
    %v176 = vld [vmem:[%s164 + $0x2c] sm:$0xf]
    %v177 = vld [vmem:[%s164 + $0x30] sm:$0xf]
    %v178 = vld [vmem:[%s164 + $0x34] sm:$0xf]
    %v179 = vld [vmem:[%s164 + $0x38] sm:$0xf]
    %v180 = vld [vmem:[%s164 + $0x3c] sm:$0xf]
    %s181 = scalar_lea.vmem [#allocation4], 8
    %v182 = vld [vmem:[%s181] sm:$0x1]
    %v183 = vlaneseq
    %v184 = vshrl.u32 %v183, 7
    %v185 = vsub.s32 0, %v184
    %v186 = vrot.slane %v182, %v185
    %v203 = vunpack.c.l.b16 %v165
    %v204 = vunpack.c.l.b16 %v166
    %v205 = vunpack.c.l.b16 %v167
    %v206 = vunpack.c.l.b16 %v168
    %v207 = vunpack.c.l.b16 %v169
    %v208 = vunpack.c.l.b16 %v170
    %v209 = vunpack.c.l.b16 %v171
    %v210 = vunpack.c.l.b16 %v172
    %v211 = vunpack.c.l.b16 %v173
    %v212 = vunpack.c.l.b16 %v174
    %v213 = vunpack.c.l.b16 %v175
    %v214 = vunpack.c.l.b16 %v176
    %v215 = vunpack.c.l.b16 %v177
    %v216 = vunpack.c.l.b16 %v178
    %v217 = vunpack.c.l.b16 %v179
    %v218 = vunpack.c.l.b16 %v180
    %v219 = vpack.c.b16 %v204, %v203
    %v220 = vpack.c.b16 %v206, %v205
    %v221 = vpack.c.b16 %v208, %v207
    %v222 = vpack.c.b16 %v210, %v209
    %v223 = vpack.c.b16 %v212, %v211
    %v224 = vpack.c.b16 %v214, %v213
    %v225 = vpack.c.b16 %v216, %v215
    %v226 = vpack.c.b16 %v218, %v217
    %235 = vmatprep.subr.bf16.mxu0 0
    %236 = vmatpush1.bf16.msra.mxu0 %v219
    %237 = vmatprep.subr.bf16.mxu0 0
    %238 = vmatpush1.bf16.msra.mxu0 %v220
    %239 = vmatprep.subr.bf16.mxu0 0
    %240 = vmatpush1.bf16.msra.mxu0 %v221
    %241 = vmatprep.subr.bf16.mxu0 0
    %242 = vmatpush1.bf16.msra.mxu0 %v222
    %243 = vmatprep.subr.bf16.mxu0 0
    %244 = vmatpush1.bf16.msra.mxu0 %v223
    %245 = vmatprep.subr.bf16.mxu0 0
    %246 = vmatpush1.bf16.msra.mxu0 %v224
    %247 = vmatprep.subr.bf16.mxu0 0
    %248 = vmatpush1.bf16.msra.mxu0 %v225
    %249 = vmatprep.subr.bf16.mxu0 0
    %250 = vmatpush1.bf16.msra.mxu0 %v226
    %251 = vmatprep.subr.bf16.mxu0 0
    %252 = vmatpush1.bf16.msra.mxu0 0
    %253 = vmatprep.subr.bf16.mxu0 0
    %254 = vmatpush1.bf16.msra.mxu0 0
    %255 = vmatprep.subr.bf16.mxu0 0
    %256 = vmatpush1.bf16.msra.mxu0 0
    %257 = vmatprep.subr.bf16.mxu0 0
    %258 = vmatpush1.bf16.msra.mxu0 0
    %259 = vmatprep.subr.bf16.mxu0 0
    %260 = vmatpush1.bf16.msra.mxu0 0
    %261 = vmatprep.subr.bf16.mxu0 0
    %262 = vmatpush1.bf16.msra.mxu0 0
    %263 = vmatprep.subr.bf16.mxu0 0
    %264 = vmatpush1.bf16.msra.mxu0 0
    %265 = vmatprep.subr.bf16.mxu0 0
    %266 = vmatpush1.bf16.msra.mxu0 0
    %267 = vmatprep.mubr.bf16.mxu0 0
    %268 = vmatmul.mubr.bf16.gmra.mrb[0].mxu0 %v163
    %v269 = vpop.f32.mrb[0].mxu0
    %v270 = vadd.f32 %v186, %v269
    %v271 = vpop.f32.mrb[0].mxu0
    %v272 = vpop.f32.mrb[0].mxu0
    %v273 = vadd.f32 %v186, %v272
    %v274 = vpop.f32.mrb[0].mxu0
    %275 = vdwg.mxu0
    %v276 = vmax.f32 %v270, 0.0
    %v277 = vmax.f32 %v273, 0.0
    %v278 = vpack.c.bf16 %v277, %v276
    %s279 = scalar_lea.vmem [#allocation2], 128
    %v280 = vld [vmem:[%s279] sm:$0xf]
    %v281 = vld [vmem:[%s279 + $0x4] sm:$0xf]
    %v282 = vld [vmem:[%s279 + $0x8] sm:$0xf]
    %v283 = vld [vmem:[%s279 + $0xc] sm:$0xf]
    %v284 = vld [vmem:[%s279 + $0x10] sm:$0xf]
    %v285 = vld [vmem:[%s279 + $0x14] sm:$0xf]
    %v286 = vld [vmem:[%s279 + $0x18] sm:$0xf]
    %v287 = vld [vmem:[%s279 + $0x1c] sm:$0xf]
    %v288 = vld [vmem:[%s279 + $0x20] sm:$0xf]
    %v289 = vld [vmem:[%s279 + $0x24] sm:$0xf]
    %v290 = vld [vmem:[%s279 + $0x28] sm:$0xf]
    %v291 = vld [vmem:[%s279 + $0x2c] sm:$0xf]
    %v292 = vld [vmem:[%s279 + $0x30] sm:$0xf]
    %v293 = vld [vmem:[%s279 + $0x34] sm:$0xf]
    %v294 = vld [vmem:[%s279 + $0x38] sm:$0xf]
    %v295 = vld [vmem:[%s279 + $0x3c] sm:$0xf]
    %s296 = scalar_lea.vmem [#allocation4], 16
    %v297 = vld [vmem:[%s296] sm:$0x1]
    %v298 = vlaneseq
    %v299 = vshrl.u32 %v298, 7
    %v300 = vsub.s32 0, %v299
    %v301 = vrot.slane %v297, %v300
    %v318 = vunpack.c.l.b16 %v280
    %v319 = vunpack.c.l.b16 %v281
    %v320 = vunpack.c.l.b16 %v282
    %v321 = vunpack.c.l.b16 %v283
    %v322 = vunpack.c.l.b16 %v284
    %v323 = vunpack.c.l.b16 %v285
    %v324 = vunpack.c.l.b16 %v286
    %v325 = vunpack.c.l.b16 %v287
    %v326 = vunpack.c.l.b16 %v288
    %v327 = vunpack.c.l.b16 %v289
    %v328 = vunpack.c.l.b16 %v290
    %v329 = vunpack.c.l.b16 %v291
    %v330 = vunpack.c.l.b16 %v292
    %v331 = vunpack.c.l.b16 %v293
    %v332 = vunpack.c.l.b16 %v294
    %v333 = vunpack.c.l.b16 %v295
    %v334 = vpack.c.b16 %v319, %v318
    %v335 = vpack.c.b16 %v321, %v320
    %v336 = vpack.c.b16 %v323, %v322
    %v337 = vpack.c.b16 %v325, %v324
    %v338 = vpack.c.b16 %v327, %v326
    %v339 = vpack.c.b16 %v329, %v328
    %v340 = vpack.c.b16 %v331, %v330
    %v341 = vpack.c.b16 %v333, %v332
    %350 = vmatprep.subr.bf16.mxu0 0
    %351 = vmatpush1.bf16.msra.mxu0 %v334
    %352 = vmatprep.subr.bf16.mxu0 0
    %353 = vmatpush1.bf16.msra.mxu0 %v335
    %354 = vmatprep.subr.bf16.mxu0 0
    %355 = vmatpush1.bf16.msra.mxu0 %v336
    %356 = vmatprep.subr.bf16.mxu0 0
    %357 = vmatpush1.bf16.msra.mxu0 %v337
    %358 = vmatprep.subr.bf16.mxu0 0
    %359 = vmatpush1.bf16.msra.mxu0 %v338
    %360 = vmatprep.subr.bf16.mxu0 0
    %361 = vmatpush1.bf16.msra.mxu0 %v339
    %362 = vmatprep.subr.bf16.mxu0 0
    %363 = vmatpush1.bf16.msra.mxu0 %v340
    %364 = vmatprep.subr.bf16.mxu0 0
    %365 = vmatpush1.bf16.msra.mxu0 %v341
    %366 = vmatprep.subr.bf16.mxu0 0
    %367 = vmatpush1.bf16.msra.mxu0 0
    %368 = vmatprep.subr.bf16.mxu0 0
    %369 = vmatpush1.bf16.msra.mxu0 0
    %370 = vmatprep.subr.bf16.mxu0 0
    %371 = vmatpush1.bf16.msra.mxu0 0
    %372 = vmatprep.subr.bf16.mxu0 0
    %373 = vmatpush1.bf16.msra.mxu0 0
    %374 = vmatprep.subr.bf16.mxu0 0
    %375 = vmatpush1.bf16.msra.mxu0 0
    %376 = vmatprep.subr.bf16.mxu0 0
    %377 = vmatpush1.bf16.msra.mxu0 0
    %378 = vmatprep.subr.bf16.mxu0 0
    %379 = vmatpush1.bf16.msra.mxu0 0
    %380 = vmatprep.subr.bf16.mxu0 0
    %381 = vmatpush1.bf16.msra.mxu0 0
    %382 = vmatprep.mubr.bf16.mxu0 0
    %383 = vmatmul.mubr.bf16.gmra.mrb[0].mxu0 %v278
    %v384 = vpop.f32.mrb[0].mxu0
    %v385 = vadd.f32 %v301, %v384
    %v386 = vpop.f32.mrb[0].mxu0
    %v387 = vpop.f32.mrb[0].mxu0
    %v388 = vadd.f32 %v301, %v387
    %v389 = vpop.f32.mrb[0].mxu0
    %390 = vdwg.mxu0
    %v391 = vmax.f32 %v385, 0.0
    %v392 = vmax.f32 %v388, 0.0
    %v393 = vpack.c.bf16 %v392, %v391
    %s394 = scalar_lea.vmem [#allocation2], 192
    %v395 = vld [vmem:[%s394] sm:$0xf]
    %v396 = vld [vmem:[%s394 + $0x4] sm:$0xf]
    %v397 = vld [vmem:[%s394 + $0x8] sm:$0xf]
    %v398 = vld [vmem:[%s394 + $0xc] sm:$0xf]
    %v399 = vld [vmem:[%s394 + $0x10] sm:$0xf]
    %v400 = vld [vmem:[%s394 + $0x14] sm:$0xf]
    %v401 = vld [vmem:[%s394 + $0x18] sm:$0xf]
    %v402 = vld [vmem:[%s394 + $0x1c] sm:$0xf]
    %v403 = vld [vmem:[%s394 + $0x20] sm:$0xf]
    %v404 = vld [vmem:[%s394 + $0x24] sm:$0xf]
    %v405 = vld [vmem:[%s394 + $0x28] sm:$0xf]
    %v406 = vld [vmem:[%s394 + $0x2c] sm:$0xf]
    %v407 = vld [vmem:[%s394 + $0x30] sm:$0xf]
    %v408 = vld [vmem:[%s394 + $0x34] sm:$0xf]
    %v409 = vld [vmem:[%s394 + $0x38] sm:$0xf]
    %v410 = vld [vmem:[%s394 + $0x3c] sm:$0xf]
    %s411 = scalar_lea.vmem [#allocation4], 24
    %v412 = vld [vmem:[%s411] sm:$0x1]
    %v413 = vlaneseq
    %v414 = vshrl.u32 %v413, 7
    %v415 = vsub.s32 0, %v414
    %v416 = vrot.slane %v412, %v415
    %v433 = vunpack.c.l.b16 %v395
    %v434 = vunpack.c.l.b16 %v396
    %v435 = vunpack.c.l.b16 %v397
    %v436 = vunpack.c.l.b16 %v398
    %v437 = vunpack.c.l.b16 %v399
    %v438 = vunpack.c.l.b16 %v400
    %v439 = vunpack.c.l.b16 %v401
    %v440 = vunpack.c.l.b16 %v402
    %v441 = vunpack.c.l.b16 %v403
    %v442 = vunpack.c.l.b16 %v404
    %v443 = vunpack.c.l.b16 %v405
    %v444 = vunpack.c.l.b16 %v406
    %v445 = vunpack.c.l.b16 %v407
    %v446 = vunpack.c.l.b16 %v408
    %v447 = vunpack.c.l.b16 %v409
    %v448 = vunpack.c.l.b16 %v410
    %v449 = vpack.c.b16 %v434, %v433
    %v450 = vpack.c.b16 %v436, %v435
    %v451 = vpack.c.b16 %v438, %v437
    %v452 = vpack.c.b16 %v440, %v439
    %v453 = vpack.c.b16 %v442, %v441
    %v454 = vpack.c.b16 %v444, %v443
    %v455 = vpack.c.b16 %v446, %v445
    %v456 = vpack.c.b16 %v448, %v447
    %465 = vmatprep.subr.bf16.mxu0 0
    %466 = vmatpush1.bf16.msra.mxu0 %v449
    %467 = vmatprep.subr.bf16.mxu0 0
    %468 = vmatpush1.bf16.msra.mxu0 %v450
    %469 = vmatprep.subr.bf16.mxu0 0
    %470 = vmatpush1.bf16.msra.mxu0 %v451
    %471 = vmatprep.subr.bf16.mxu0 0
    %472 = vmatpush1.bf16.msra.mxu0 %v452
    %473 = vmatprep.subr.bf16.mxu0 0
    %474 = vmatpush1.bf16.msra.mxu0 %v453
    %475 = vmatprep.subr.bf16.mxu0 0
    %476 = vmatpush1.bf16.msra.mxu0 %v454
    %477 = vmatprep.subr.bf16.mxu0 0
    %478 = vmatpush1.bf16.msra.mxu0 %v455
    %479 = vmatprep.subr.bf16.mxu0 0
    %480 = vmatpush1.bf16.msra.mxu0 %v456
    %481 = vmatprep.subr.bf16.mxu0 0
    %482 = vmatpush1.bf16.msra.mxu0 0
    %483 = vmatprep.subr.bf16.mxu0 0
    %484 = vmatpush1.bf16.msra.mxu0 0
    %485 = vmatprep.subr.bf16.mxu0 0
    %486 = vmatpush1.bf16.msra.mxu0 0
    %487 = vmatprep.subr.bf16.mxu0 0
    %488 = vmatpush1.bf16.msra.mxu0 0
    %489 = vmatprep.subr.bf16.mxu0 0
    %490 = vmatpush1.bf16.msra.mxu0 0
    %491 = vmatprep.subr.bf16.mxu0 0
    %492 = vmatpush1.bf16.msra.mxu0 0
    %493 = vmatprep.subr.bf16.mxu0 0
    %494 = vmatpush1.bf16.msra.mxu0 0
    %495 = vmatprep.subr.bf16.mxu0 0
    %496 = vmatpush1.bf16.msra.mxu0 0
    %497 = vmatprep.mubr.bf16.mxu0 0
    %498 = vmatmul.mubr.bf16.gmra.mrb[0].mxu0 %v393
    %v499 = vpop.f32.mrb[0].mxu0
    %v500 = vadd.f32 %v416, %v499
    %v501 = vpop.f32.mrb[0].mxu0
    %v502 = vpop.f32.mrb[0].mxu0
    %v503 = vadd.f32 %v416, %v502
    %v504 = vpop.f32.mrb[0].mxu0
    %505 = vdwg.mxu0
    %v506 = vmax.f32 %v500, 0.0
    %v507 = vmax.f32 %v503, 0.0
    %v508 = vpack.c.bf16 %v507, %v506
    %s509 = scalar_lea.vmem [#allocation2], 256
    %v510 = vld [vmem:[%s509] sm:$0xf]
    %v511 = vld [vmem:[%s509 + $0x4] sm:$0xf]
    %v512 = vld [vmem:[%s509 + $0x8] sm:$0xf]
    %v513 = vld [vmem:[%s509 + $0xc] sm:$0xf]
    %v514 = vld [vmem:[%s509 + $0x10] sm:$0xf]
    %v515 = vld [vmem:[%s509 + $0x14] sm:$0xf]
    %v516 = vld [vmem:[%s509 + $0x18] sm:$0xf]
    %v517 = vld [vmem:[%s509 + $0x1c] sm:$0xf]
    %v518 = vld [vmem:[%s509 + $0x20] sm:$0xf]
    %v519 = vld [vmem:[%s509 + $0x24] sm:$0xf]
    %v520 = vld [vmem:[%s509 + $0x28] sm:$0xf]
    %v521 = vld [vmem:[%s509 + $0x2c] sm:$0xf]
    %v522 = vld [vmem:[%s509 + $0x30] sm:$0xf]
    %v523 = vld [vmem:[%s509 + $0x34] sm:$0xf]
    %v524 = vld [vmem:[%s509 + $0x38] sm:$0xf]
    %v525 = vld [vmem:[%s509 + $0x3c] sm:$0xf]
    %s526 = scalar_lea.vmem [#allocation4], 32
    %v527 = vld [vmem:[%s526] sm:$0x1]
    %v528 = vlaneseq
    %v529 = vshrl.u32 %v528, 7
    %v530 = vsub.s32 0, %v529
    %v531 = vrot.slane %v527, %v530
    %v548 = vunpack.c.l.b16 %v510
    %v549 = vunpack.c.l.b16 %v511
    %v550 = vunpack.c.l.b16 %v512
    %v551 = vunpack.c.l.b16 %v513
    %v552 = vunpack.c.l.b16 %v514
    %v553 = vunpack.c.l.b16 %v515
    %v554 = vunpack.c.l.b16 %v516
    %v555 = vunpack.c.l.b16 %v517
    %v556 = vunpack.c.l.b16 %v518
    %v557 = vunpack.c.l.b16 %v519
    %v558 = vunpack.c.l.b16 %v520
    %v559 = vunpack.c.l.b16 %v521
    %v560 = vunpack.c.l.b16 %v522
    %v561 = vunpack.c.l.b16 %v523
    %v562 = vunpack.c.l.b16 %v524
    %v563 = vunpack.c.l.b16 %v525
    %v564 = vpack.c.b16 %v549, %v548
    %v565 = vpack.c.b16 %v551, %v550
    %v566 = vpack.c.b16 %v553, %v552
    %v567 = vpack.c.b16 %v555, %v554
    %v568 = vpack.c.b16 %v557, %v556
    %v569 = vpack.c.b16 %v559, %v558
    %v570 = vpack.c.b16 %v561, %v560
    %v571 = vpack.c.b16 %v563, %v562
    %580 = vmatprep.subr.bf16.mxu0 0
    %581 = vmatpush1.bf16.msra.mxu0 %v564
    %582 = vmatprep.subr.bf16.mxu0 0
    %583 = vmatpush1.bf16.msra.mxu0 %v565
    %584 = vmatprep.subr.bf16.mxu0 0
    %585 = vmatpush1.bf16.msra.mxu0 %v566
    %586 = vmatprep.subr.bf16.mxu0 0
    %587 = vmatpush1.bf16.msra.mxu0 %v567
    %588 = vmatprep.subr.bf16.mxu0 0
    %589 = vmatpush1.bf16.msra.mxu0 %v568
    %590 = vmatprep.subr.bf16.mxu0 0
    %591 = vmatpush1.bf16.msra.mxu0 %v569
    %592 = vmatprep.subr.bf16.mxu0 0
    %593 = vmatpush1.bf16.msra.mxu0 %v570
    %594 = vmatprep.subr.bf16.mxu0 0
    %595 = vmatpush1.bf16.msra.mxu0 %v571
    %596 = vmatprep.subr.bf16.mxu0 0
    %597 = vmatpush1.bf16.msra.mxu0 0
    %598 = vmatprep.subr.bf16.mxu0 0
    %599 = vmatpush1.bf16.msra.mxu0 0
    %600 = vmatprep.subr.bf16.mxu0 0
    %601 = vmatpush1.bf16.msra.mxu0 0
    %602 = vmatprep.subr.bf16.mxu0 0
    %603 = vmatpush1.bf16.msra.mxu0 0
    %604 = vmatprep.subr.bf16.mxu0 0
    %605 = vmatpush1.bf16.msra.mxu0 0
    %606 = vmatprep.subr.bf16.mxu0 0
    %607 = vmatpush1.bf16.msra.mxu0 0
    %608 = vmatprep.subr.bf16.mxu0 0
    %609 = vmatpush1.bf16.msra.mxu0 0
    %610 = vmatprep.subr.bf16.mxu0 0
    %611 = vmatpush1.bf16.msra.mxu0 0
    %612 = vmatprep.mubr.bf16.mxu0 0
    %613 = vmatmul.mubr.bf16.gmra.mrb[0].mxu0 %v508
    %v614 = vpop.f32.mrb[0].mxu0
    %v615 = vadd.f32 %v531, %v614
    %v616 = vpop.f32.mrb[0].mxu0
    %v617 = vpop.f32.mrb[0].mxu0
    %v618 = vadd.f32 %v531, %v617
    %v619 = vpop.f32.mrb[0].mxu0
    %620 = vdwg.mxu0
    %v621 = vmax.f32 %v615, 0.0
    %v622 = vmax.f32 %v618, 0.0
    %v623 = vpack.c.bf16 %v622, %v621
    %s624 = scalar_lea.vmem [#allocation2], 320
    %v625 = vld [vmem:[%s624] sm:$0xf]
    %v626 = vld [vmem:[%s624 + $0x4] sm:$0xf]
    %v627 = vld [vmem:[%s624 + $0x8] sm:$0xf]
    %v628 = vld [vmem:[%s624 + $0xc] sm:$0xf]
    %v629 = vld [vmem:[%s624 + $0x10] sm:$0xf]
    %v630 = vld [vmem:[%s624 + $0x14] sm:$0xf]
    %v631 = vld [vmem:[%s624 + $0x18] sm:$0xf]
    %v632 = vld [vmem:[%s624 + $0x1c] sm:$0xf]
    %v633 = vld [vmem:[%s624 + $0x20] sm:$0xf]
    %v634 = vld [vmem:[%s624 + $0x24] sm:$0xf]
    %v635 = vld [vmem:[%s624 + $0x28] sm:$0xf]
    %v636 = vld [vmem:[%s624 + $0x2c] sm:$0xf]
    %v637 = vld [vmem:[%s624 + $0x30] sm:$0xf]
    %v638 = vld [vmem:[%s624 + $0x34] sm:$0xf]
    %v639 = vld [vmem:[%s624 + $0x38] sm:$0xf]
    %v640 = vld [vmem:[%s624 + $0x3c] sm:$0xf]
    %s641 = scalar_lea.vmem [#allocation4], 40
    %v642 = vld [vmem:[%s641] sm:$0x1]
    %v643 = vlaneseq
    %v644 = vshrl.u32 %v643, 7
    %v645 = vsub.s32 0, %v644
    %v646 = vrot.slane %v642, %v645
    %v663 = vunpack.c.l.b16 %v625
    %v664 = vunpack.c.l.b16 %v626
    %v665 = vunpack.c.l.b16 %v627
    %v666 = vunpack.c.l.b16 %v628
    %v667 = vunpack.c.l.b16 %v629
    %v668 = vunpack.c.l.b16 %v630
    %v669 = vunpack.c.l.b16 %v631
    %v670 = vunpack.c.l.b16 %v632
    %v671 = vunpack.c.l.b16 %v633
    %v672 = vunpack.c.l.b16 %v634
    %v673 = vunpack.c.l.b16 %v635
    %v674 = vunpack.c.l.b16 %v636
    %v675 = vunpack.c.l.b16 %v637
    %v676 = vunpack.c.l.b16 %v638
    %v677 = vunpack.c.l.b16 %v639
    %v678 = vunpack.c.l.b16 %v640
    %v679 = vpack.c.b16 %v664, %v663
    %v680 = vpack.c.b16 %v666, %v665
    %v681 = vpack.c.b16 %v668, %v667
    %v682 = vpack.c.b16 %v670, %v669
    %v683 = vpack.c.b16 %v672, %v671
    %v684 = vpack.c.b16 %v674, %v673
    %v685 = vpack.c.b16 %v676, %v675
    %v686 = vpack.c.b16 %v678, %v677
    %695 = vmatprep.subr.bf16.mxu0 0
    %696 = vmatpush1.bf16.msra.mxu0 %v679
    %697 = vmatprep.subr.bf16.mxu0 0
    %698 = vmatpush1.bf16.msra.mxu0 %v680
    %699 = vmatprep.subr.bf16.mxu0 0
    %700 = vmatpush1.bf16.msra.mxu0 %v681
    %701 = vmatprep.subr.bf16.mxu0 0
    %702 = vmatpush1.bf16.msra.mxu0 %v682
    %703 = vmatprep.subr.bf16.mxu0 0
    %704 = vmatpush1.bf16.msra.mxu0 %v683
    %705 = vmatprep.subr.bf16.mxu0 0
    %706 = vmatpush1.bf16.msra.mxu0 %v684
    %707 = vmatprep.subr.bf16.mxu0 0
    %708 = vmatpush1.bf16.msra.mxu0 %v685
    %709 = vmatprep.subr.bf16.mxu0 0
    %710 = vmatpush1.bf16.msra.mxu0 %v686
    %711 = vmatprep.subr.bf16.mxu0 0
    %712 = vmatpush1.bf16.msra.mxu0 0
    %713 = vmatprep.subr.bf16.mxu0 0
    %714 = vmatpush1.bf16.msra.mxu0 0
    %715 = vmatprep.subr.bf16.mxu0 0
    %716 = vmatpush1.bf16.msra.mxu0 0
    %717 = vmatprep.subr.bf16.mxu0 0
    %718 = vmatpush1.bf16.msra.mxu0 0
    %719 = vmatprep.subr.bf16.mxu0 0
    %720 = vmatpush1.bf16.msra.mxu0 0
    %721 = vmatprep.subr.bf16.mxu0 0
    %722 = vmatpush1.bf16.msra.mxu0 0
    %723 = vmatprep.subr.bf16.mxu0 0
    %724 = vmatpush1.bf16.msra.mxu0 0
    %725 = vmatprep.subr.bf16.mxu0 0
    %726 = vmatpush1.bf16.msra.mxu0 0
    %727 = vmatprep.mubr.bf16.mxu0 0
    %728 = vmatmul.mubr.bf16.gmra.mrb[0].mxu0 %v623
    %v729 = vpop.f32.mrb[0].mxu0
    %v730 = vadd.f32 %v646, %v729
    %v731 = vpop.f32.mrb[0].mxu0
    %v732 = vpop.f32.mrb[0].mxu0
    %v733 = vadd.f32 %v646, %v732
    %v734 = vpop.f32.mrb[0].mxu0
    %735 = vdwg.mxu0
    %v736 = vmax.f32 %v730, 0.0
    %v737 = vmax.f32 %v733, 0.0
    %v738 = vpack.c.bf16 %v737, %v736
    %s739 = scalar_lea.vmem [#allocation2], 384
    %v740 = vld [vmem:[%s739] sm:$0xf]
    %v741 = vld [vmem:[%s739 + $0x4] sm:$0xf]
    %v742 = vld [vmem:[%s739 + $0x8] sm:$0xf]
    %v743 = vld [vmem:[%s739 + $0xc] sm:$0xf]
    %v744 = vld [vmem:[%s739 + $0x10] sm:$0xf]
    %v745 = vld [vmem:[%s739 + $0x14] sm:$0xf]
    %v746 = vld [vmem:[%s739 + $0x18] sm:$0xf]
    %v747 = vld [vmem:[%s739 + $0x1c] sm:$0xf]
    %v748 = vld [vmem:[%s739 + $0x20] sm:$0xf]
    %v749 = vld [vmem:[%s739 + $0x24] sm:$0xf]
    %v750 = vld [vmem:[%s739 + $0x28] sm:$0xf]
    %v751 = vld [vmem:[%s739 + $0x2c] sm:$0xf]
    %v752 = vld [vmem:[%s739 + $0x30] sm:$0xf]
    %v753 = vld [vmem:[%s739 + $0x34] sm:$0xf]
    %v754 = vld [vmem:[%s739 + $0x38] sm:$0xf]
    %v755 = vld [vmem:[%s739 + $0x3c] sm:$0xf]
    %s756 = scalar_lea.vmem [#allocation4], 48
    %v757 = vld [vmem:[%s756] sm:$0x1]
    %v758 = vlaneseq
    %v759 = vshrl.u32 %v758, 7
    %v760 = vsub.s32 0, %v759
    %v761 = vrot.slane %v757, %v760
    %v778 = vunpack.c.l.b16 %v740
    %v779 = vunpack.c.l.b16 %v741
    %v780 = vunpack.c.l.b16 %v742
    %v781 = vunpack.c.l.b16 %v743
    %v782 = vunpack.c.l.b16 %v744
    %v783 = vunpack.c.l.b16 %v745
    %v784 = vunpack.c.l.b16 %v746
    %v785 = vunpack.c.l.b16 %v747
    %v786 = vunpack.c.l.b16 %v748
    %v787 = vunpack.c.l.b16 %v749
    %v788 = vunpack.c.l.b16 %v750
    %v789 = vunpack.c.l.b16 %v751
    %v790 = vunpack.c.l.b16 %v752
    %v791 = vunpack.c.l.b16 %v753
    %v792 = vunpack.c.l.b16 %v754
    %v793 = vunpack.c.l.b16 %v755
    %v794 = vpack.c.b16 %v779, %v778
    %v795 = vpack.c.b16 %v781, %v780
    %v796 = vpack.c.b16 %v783, %v782
    %v797 = vpack.c.b16 %v785, %v784
    %v798 = vpack.c.b16 %v787, %v786
    %v799 = vpack.c.b16 %v789, %v788
    %v800 = vpack.c.b16 %v791, %v790
    %v801 = vpack.c.b16 %v793, %v792
    %810 = vmatprep.subr.bf16.mxu0 0
    %811 = vmatpush1.bf16.msra.mxu0 %v794
    %812 = vmatprep.subr.bf16.mxu0 0
    %813 = vmatpush1.bf16.msra.mxu0 %v795
    %814 = vmatprep.subr.bf16.mxu0 0
    %815 = vmatpush1.bf16.msra.mxu0 %v796
    %816 = vmatprep.subr.bf16.mxu0 0
    %817 = vmatpush1.bf16.msra.mxu0 %v797
    %818 = vmatprep.subr.bf16.mxu0 0
    %819 = vmatpush1.bf16.msra.mxu0 %v798
    %820 = vmatprep.subr.bf16.mxu0 0
    %821 = vmatpush1.bf16.msra.mxu0 %v799
    %822 = vmatprep.subr.bf16.mxu0 0
    %823 = vmatpush1.bf16.msra.mxu0 %v800
    %824 = vmatprep.subr.bf16.mxu0 0
    %825 = vmatpush1.bf16.msra.mxu0 %v801
    %826 = vmatprep.subr.bf16.mxu0 0
    %827 = vmatpush1.bf16.msra.mxu0 0
    %828 = vmatprep.subr.bf16.mxu0 0
    %829 = vmatpush1.bf16.msra.mxu0 0
    %830 = vmatprep.subr.bf16.mxu0 0
    %831 = vmatpush1.bf16.msra.mxu0 0
    %832 = vmatprep.subr.bf16.mxu0 0
    %833 = vmatpush1.bf16.msra.mxu0 0
    %834 = vmatprep.subr.bf16.mxu0 0
    %835 = vmatpush1.bf16.msra.mxu0 0
    %836 = vmatprep.subr.bf16.mxu0 0
    %837 = vmatpush1.bf16.msra.mxu0 0
    %838 = vmatprep.subr.bf16.mxu0 0
    %839 = vmatpush1.bf16.msra.mxu0 0
    %840 = vmatprep.subr.bf16.mxu0 0
    %841 = vmatpush1.bf16.msra.mxu0 0
    %842 = vmatprep.mubr.bf16.mxu0 0
    %843 = vmatmul.mubr.bf16.gmra.mrb[0].mxu0 %v738
    %v844 = vpop.f32.mrb[0].mxu0
    %v845 = vadd.f32 %v761, %v844
    %v846 = vpop.f32.mrb[0].mxu0
    %v847 = vpop.f32.mrb[0].mxu0
    %v848 = vadd.f32 %v761, %v847
    %v849 = vpop.f32.mrb[0].mxu0
    %850 = vdwg.mxu0
    %v851 = vmax.f32 %v845, 0.0
    %v852 = vmax.f32 %v848, 0.0
    %v853 = vpack.c.bf16 %v852, %v851
    %s854 = scalar_lea.vmem [#allocation2], 448
    %v855 = vld [vmem:[%s854] sm:$0xf]
    %v856 = vld [vmem:[%s854 + $0x4] sm:$0xf]
    %v857 = vld [vmem:[%s854 + $0x8] sm:$0xf]
    %v858 = vld [vmem:[%s854 + $0xc] sm:$0xf]
    %v859 = vld [vmem:[%s854 + $0x10] sm:$0xf]
    %v860 = vld [vmem:[%s854 + $0x14] sm:$0xf]
    %v861 = vld [vmem:[%s854 + $0x18] sm:$0xf]
    %v862 = vld [vmem:[%s854 + $0x1c] sm:$0xf]
    %v863 = vld [vmem:[%s854 + $0x20] sm:$0xf]
    %v864 = vld [vmem:[%s854 + $0x24] sm:$0xf]
    %v865 = vld [vmem:[%s854 + $0x28] sm:$0xf]
    %v866 = vld [vmem:[%s854 + $0x2c] sm:$0xf]
    %v867 = vld [vmem:[%s854 + $0x30] sm:$0xf]
    %v868 = vld [vmem:[%s854 + $0x34] sm:$0xf]
    %v869 = vld [vmem:[%s854 + $0x38] sm:$0xf]
    %v870 = vld [vmem:[%s854 + $0x3c] sm:$0xf]
    %s871 = scalar_lea.vmem [#allocation4], 56
    %v872 = vld [vmem:[%s871] sm:$0x1]
    %v873 = vlaneseq
    %v874 = vshrl.u32 %v873, 7
    %v875 = vsub.s32 0, %v874
    %v876 = vrot.slane %v872, %v875
    %v893 = vunpack.c.l.b16 %v855
    %v894 = vunpack.c.l.b16 %v856
    %v895 = vunpack.c.l.b16 %v857
    %v896 = vunpack.c.l.b16 %v858
    %v897 = vunpack.c.l.b16 %v859
    %v898 = vunpack.c.l.b16 %v860
    %v899 = vunpack.c.l.b16 %v861
    %v900 = vunpack.c.l.b16 %v862
    %v901 = vunpack.c.l.b16 %v863
    %v902 = vunpack.c.l.b16 %v864
    %v903 = vunpack.c.l.b16 %v865
    %v904 = vunpack.c.l.b16 %v866
    %v905 = vunpack.c.l.b16 %v867
    %v906 = vunpack.c.l.b16 %v868
    %v907 = vunpack.c.l.b16 %v869
    %v908 = vunpack.c.l.b16 %v870
    %v909 = vpack.c.b16 %v894, %v893
    %v910 = vpack.c.b16 %v896, %v895
    %v911 = vpack.c.b16 %v898, %v897
    %v912 = vpack.c.b16 %v900, %v899
    %v913 = vpack.c.b16 %v902, %v901
    %v914 = vpack.c.b16 %v904, %v903
    %v915 = vpack.c.b16 %v906, %v905
    %v916 = vpack.c.b16 %v908, %v907
    %925 = vmatprep.subr.bf16.mxu0 0
    %926 = vmatpush1.bf16.msra.mxu0 %v909
    %927 = vmatprep.subr.bf16.mxu0 0
    %928 = vmatpush1.bf16.msra.mxu0 %v910
    %929 = vmatprep.subr.bf16.mxu0 0
    %930 = vmatpush1.bf16.msra.mxu0 %v911
    %931 = vmatprep.subr.bf16.mxu0 0
    %932 = vmatpush1.bf16.msra.mxu0 %v912
    %933 = vmatprep.subr.bf16.mxu0 0
    %934 = vmatpush1.bf16.msra.mxu0 %v913
    %935 = vmatprep.subr.bf16.mxu0 0
    %936 = vmatpush1.bf16.msra.mxu0 %v914
    %937 = vmatprep.subr.bf16.mxu0 0
    %938 = vmatpush1.bf16.msra.mxu0 %v915
    %939 = vmatprep.subr.bf16.mxu0 0
    %940 = vmatpush1.bf16.msra.mxu0 %v916
    %941 = vmatprep.subr.bf16.mxu0 0
    %942 = vmatpush1.bf16.msra.mxu0 0
    %943 = vmatprep.subr.bf16.mxu0 0
    %944 = vmatpush1.bf16.msra.mxu0 0
    %945 = vmatprep.subr.bf16.mxu0 0
    %946 = vmatpush1.bf16.msra.mxu0 0
    %947 = vmatprep.subr.bf16.mxu0 0
    %948 = vmatpush1.bf16.msra.mxu0 0
    %949 = vmatprep.subr.bf16.mxu0 0
    %950 = vmatpush1.bf16.msra.mxu0 0
    %951 = vmatprep.subr.bf16.mxu0 0
    %952 = vmatpush1.bf16.msra.mxu0 0
    %953 = vmatprep.subr.bf16.mxu0 0
    %954 = vmatpush1.bf16.msra.mxu0 0
    %955 = vmatprep.subr.bf16.mxu0 0
    %956 = vmatpush1.bf16.msra.mxu0 0
    %957 = vmatprep.mubr.bf16.mxu0 0
    %958 = vmatmul.mubr.bf16.gmra.mrb[0].mxu0 %v853
    %v959 = vpop.f32.mrb[0].mxu0
    %v960 = vadd.f32 %v876, %v959
    %v961 = vpop.f32.mrb[0].mxu0
    %v962 = vpop.f32.mrb[0].mxu0
    %v963 = vadd.f32 %v876, %v962
    %v964 = vpop.f32.mrb[0].mxu0
    %965 = vdwg.mxu0
    %966 = vst [vmem:[%s3] sm:$0xff] %v960
    %967 = vst [vmem:[%s3 + $0x8] sm:$0xff] %v963
    // Predicated region
    $region22: #{linear_qnet_forward.1} parent=1 // pred_check
      _
    $region23: #{linear_qnet_forward.1} parent=1 // pred_check_branch
      %969 = sbr.rel (0) target = $region25
    $region24: #{linear_qnet_forward.1} parent=1 // pred_region
      _
    $region25: #{linear_qnet_forward.1} parent=1 // pred_fallthru
      _
    // Predicated region
    $region26: #{linear_qnet_forward.1} parent=1 // pred_check
      _
    $region27: #{linear_qnet_forward.1} parent=1 // pred_check_branch
      %971 = sbr.rel (0) target = $region29
    $region28: #{linear_qnet_forward.1} parent=1 // pred_region
      _
    $region29: #{linear_qnet_forward.1} parent=1 // pred_fallthru
      _
    %972 = vsyncpa [#allocation3], 1
    %973 = vsyncpa [#allocation5], 1

</llo_original>
